<compile_context>
chip_gen: v6e
topology: v6e:2x2x1
jax: 0.10.0
libtpu: 0.0.40
codegen_flags: <defaults>
</compile_context>

<pallas_src>
import functools

import jax
import jax.numpy as jnp
from jax.experimental import pallas as pl
from jax.experimental.pallas import tpu as pltpu


_VMEM = pl.BlockSpec(memory_space=pltpu.MemorySpace.VMEM)
_LANE = 128


def _round_up(x, m):
    return (x + m - 1) // m * m


# ----------------------------------------------------------------------------
# Per-layer GIN kernel: dst-row tiled aggregation + 2-layer MLP
# ----------------------------------------------------------------------------
def _gin_layer_kernel(a_ref, hfull_ref, hself_ref, w1_ref, b1_ref, w2_ref, b2_ref,
                      o_ref):
    # GIN sum-aggregation (eps = 0): self term + neighbor sum over this dst-row tile.
    agg = hself_ref[...].astype(jnp.float32) + jnp.dot(
        a_ref[...], hfull_ref[...], preferred_element_type=jnp.float32)
    # MLP: Linear -> ReLU -> Linear.  Matmul operands in bf16, accumulate + epilogue f32.
    t = jnp.dot(agg.astype(jnp.bfloat16), w1_ref[...],
                preferred_element_type=jnp.float32) + b1_ref[...]
    t = jnp.maximum(t, 0.0)
    h = jnp.dot(t.astype(jnp.bfloat16), w2_ref[...],
                preferred_element_type=jnp.float32) + b2_ref[...]
    o_ref[...] = h.astype(o_ref.dtype)


def _layer_vmem_limit(npad, fpad, tile_m):
    bf16 = 2
    per_step = (tile_m * npad * bf16      # adjacency dst-row tile
                + npad * fpad * bf16      # full h (resident)
                + tile_m * fpad * bf16    # self-term rows
                + 2 * fpad * fpad * bf16  # w1, w2
                + 2 * fpad * 4            # b1, b2 (f32)
                + tile_m * fpad * bf16)   # output tile
    est = per_step * 2 * 2                # double-buffering + headroom
    return int(min(max(est, 16 * 1024 * 1024), 48 * 1024 * 1024))


def _gin_layer(adj, h, w1, b1, w2, b2, *, tile_m):
    npad, fpad = h.shape
    ntiles = npad // tile_m
    flops = 2 * npad * npad * fpad + 2 * (2 * npad * fpad * fpad)
    bytes_accessed = (adj.nbytes + h.nbytes * (ntiles + 1) + w1.nbytes + w2.nbytes
                      + b1.nbytes + b2.nbytes + npad * fpad * 2)
    grid_spec = pltpu.PrefetchScalarGridSpec(
        num_scalar_prefetch=0,
        grid=(ntiles,),
        in_specs=[
            pl.BlockSpec((tile_m, npad), lambda i: (i, 0)),   # A dst-row tile (streamed)
            pl.BlockSpec((npad, fpad), lambda i: (0, 0)),     # full h_prev (resident)
            pl.BlockSpec((tile_m, fpad), lambda i: (i, 0)),   # h_prev rows for self term
            pl.BlockSpec((fpad, fpad), lambda i: (0, 0)),     # w1
            pl.BlockSpec((1, fpad), lambda i: (0, 0)),        # b1 (f32)
            pl.BlockSpec((fpad, fpad), lambda i: (0, 0)),     # w2
            pl.BlockSpec((1, fpad), lambda i: (0, 0)),        # b2 (f32)
        ],
        out_specs=pl.BlockSpec((tile_m, fpad), lambda i: (i, 0)),
    )
    return pl.pallas_call(
        _gin_layer_kernel,
        out_shape=jax.ShapeDtypeStruct((npad, fpad), jnp.bfloat16),
        grid_spec=grid_spec,
        compiler_params=pltpu.CompilerParams(
            dimension_semantics=("parallel",),
            vmem_limit_bytes=_layer_vmem_limit(npad, fpad, tile_m)),
        cost_estimate=pl.CostEstimate(flops=int(flops), transcendentals=0,
                                      bytes_accessed=int(bytes_accessed)),
    )(adj, h, h, w1, b1, w2, b2)


# ----------------------------------------------------------------------------
# Head kernel: mean-pool + FC + sigmoid (reordered as pool @ (h @ Wf))
# ----------------------------------------------------------------------------
def _head_kernel(pool_ref, h_ref, wf_ref, bf_ref, o_ref):
    xf = jnp.dot(h_ref[...], wf_ref[...], preferred_element_type=jnp.float32)  # [N, 1]
    logit = jnp.dot(pool_ref[...], xf, preferred_element_type=jnp.float32) + bf_ref[...]
    o_ref[...] = jax.nn.sigmoid(logit)


def _head(pool, h, wf, bf):
    num_graphs, npad = pool.shape
    fpad = h.shape[1]
    est = (pool.nbytes + h.nbytes + wf.nbytes + bf.nbytes + num_graphs * 4) * 4
    return pl.pallas_call(
        _head_kernel,
        out_shape=jax.ShapeDtypeStruct((num_graphs, 1), jnp.float32),
        in_specs=[_VMEM] * 4,
        out_specs=_VMEM,
        compiler_params=pltpu.CompilerParams(
            vmem_limit_bytes=int(min(max(est, 16 * 1024 * 1024), 48 * 1024 * 1024))),
        cost_estimate=pl.CostEstimate(
            flops=int(2 * npad * fpad + 2 * num_graphs * npad),
            transcendentals=int(num_graphs),
            bytes_accessed=int(pool.nbytes + h.nbytes + wf.nbytes + bf.nbytes
                               + num_graphs * 4)),
    )(pool, h, wf, bf)


# ----------------------------------------------------------------------------
# Parameter setup (plain JAX glue)
# ----------------------------------------------------------------------------
def _spectral_normalize(w):
    """Divide weight by its largest singular value (eval-mode spectral_norm)."""
    # TODO(synk): PyTorch uses a power-iteration estimate of sigma; we use the exact value.
    sigma = jnp.linalg.norm(w, ord=2)
    return w / sigma


def _init_linear(key, fan_in, fan_out):
    """PyTorch-style uniform init; weight returned pre-transposed as [in, out]."""
    kw, kb = jax.random.split(key)
    bound = 1.0 / jnp.sqrt(jnp.float32(fan_in))
    w = jax.random.uniform(kw, (fan_in, fan_out), jnp.float32, -bound, bound)
    b = jax.random.uniform(kb, (1, fan_out), jnp.float32, -bound, bound)
    return w, b


def init_discriminator_params(key, input_dim, hidden_dim, num_layers):
    params = {"layers": []}
    keys = jax.random.split(key, num_layers * 2 + 1)
    for i in range(num_layers):
        in_dim = input_dim if i == 0 else hidden_dim
        w1, b1 = _init_linear(keys[2 * i], in_dim, hidden_dim)
        w2, b2 = _init_linear(keys[2 * i + 1], hidden_dim, hidden_dim)
        params["layers"].append(
            (_spectral_normalize(w1), b1, _spectral_normalize(w2), b2))
    wf, bf = _init_linear(keys[-1], hidden_dim, 1)
    params["fc"] = (wf, bf)
    return params


def prepare_kernel_params(params, fpad):
    """Zero-pad all feature dims to 128 lanes; cast matmul operands to bf16, biases f32."""
    def pad_mat(w, rows, cols):
        return jnp.zeros((rows, cols), jnp.float32).at[:w.shape[0], :w.shape[1]].set(w)

    layers = []
    for (w1, b1, w2, b2) in params["layers"]:
        layers.append((
            pad_mat(w1, fpad, fpad).astype(jnp.bfloat16),
            pad_mat(b1, 1, fpad),                       # bias stays f32 (epilogue math)
            pad_mat(w2, fpad, fpad).astype(jnp.bfloat16),
            pad_mat(b2, 1, fpad),
        ))
    wf, bf = params["fc"]
    wf_p = pad_mat(wf, fpad, 1).astype(jnp.bfloat16)
    return {"layers": layers, "fc": (wf_p, bf)}


def densify_graph(edge_index, batch, num_nodes, num_graphs, num_nodes_pad):
    """edge_index [2, E] (src, dst) -> dense adjacency [Npad, Npad];
    batch [N] -> mean-pool matrix [B, Npad] (padded nodes get zero pool weight)."""
    src, dst = edge_index[0], edge_index[1]
    adj = jnp.zeros((num_nodes_pad, num_nodes_pad), jnp.float32).at[dst, src].add(1.0)
    batch_pad = jnp.full((num_nodes_pad,), -1, jnp.int32).at[:num_nodes].set(
        batch.astype(jnp.int32))
    onehot = (batch_pad[None, :] ==
              jnp.arange(num_graphs, dtype=jnp.int32)[:, None]).astype(jnp.float32)
    counts = jnp.maximum(onehot.sum(axis=1, keepdims=True), 1.0)
    pool = onehot / counts
    return adj, pool


# ----------------------------------------------------------------------------
# Forward pass (wrapper)
# ----------------------------------------------------------------------------
@functools.partial(jax.jit, static_argnames=("num_graphs", "tile_m"))
def discriminator_forward(kparams, x, edge_index, batch, *, num_graphs, tile_m=8):
    num_nodes, in_dim = x.shape
    fpad = kparams["layers"][0][0].shape[0]
    npad = _round_up(num_nodes, tile_m)

    # Zero-pad node features to [Npad, FPAD]; cast matmul operand to bf16.
    h = jnp.zeros((npad, fpad), jnp.float32).at[:num_nodes, :in_dim].set(x)
    h = h.astype(jnp.bfloat16)

    adj, pool = densify_graph(edge_index, batch, num_nodes, num_graphs, npad)
    adj = adj.astype(jnp.bfloat16)   # small integer edge counts -> exact in bf16

    for (w1, b1, w2, b2) in kparams["layers"]:
        h = _gin_layer(adj, h, w1, b1, w2, b2, tile_m=tile_m)

    wf, bf = kparams["fc"]
    return _head(pool, h, wf, bf)


# ----------------------------------------------------------------------------
# Pure-JAX reference (f32, unpadded) for correctness checking
# ----------------------------------------------------------------------------
def discriminator_reference(params, x, edge_index, batch, num_graphs):
    adj, pool = densify_graph(edge_index, batch, x.shape[0], num_graphs, x.shape[0])
    h = x
    for (w1, b1, w2, b2) in params["layers"]:
        agg = h + adj @ h
        h = jnp.maximum(agg @ w1 + b1, 0.0) @ w2 + b2
    wf, bf = params["fc"]
    return jax.nn.sigmoid(pool @ h @ wf + bf)


# ----------------------------------------------------------------------------
# Main
# ----------------------------------------------------------------------------
if __name__ == "__main__":
    INPUT_DIM = 8
    HIDDEN_DIM = 32
    NUM_LAYERS = 3
    NUM_NODES = 16
    NUM_GRAPHS = 2
    TILE_M = 8   # dst-row tile; use 128 for production-sized graphs

    key = jax.random.PRNGKey(0)
    k_param, k_x, k_edge = jax.random.split(key, 3)

    params = init_discriminator_params(k_param, INPUT_DIM, HIDDEN_DIM, NUM_LAYERS)
    FPAD = _round_up(max(INPUT_DIM, HIDDEN_DIM), _LANE)
    kparams = prepare_kernel_params(params, FPAD)

    # Node features.
    x = jax.random.normal(k_x, (NUM_NODES, INPUT_DIM), jnp.float32)

    # Deterministic edge_index: a ring within each graph plus a few extra edges.
    half = NUM_NODES // NUM_GRAPHS
    src_list, dst_list = [], []
    for g in range(NUM_GRAPHS):
        base = g * half
        for i in range(half):
            s, d = base + i, base + (i + 1) % half
            src_list += [s, d]
            dst_list += [d, s]
    extra_src = jax.random.randint(k_edge, (4,), 0, half)
    extra_dst = (extra_src + 3) % half
    src = jnp.concatenate([jnp.array(src_list, jnp.int32), extra_src.astype(jnp.int32)])
    dst = jnp.concatenate([jnp.array(dst_list, jnp.int32), extra_dst.astype(jnp.int32)])
    edge_index = jnp.stack([src, dst], axis=0)  # [2, E], (source, target)

    # Batch assignment: first half of nodes -> graph 0, second half -> graph 1.
    batch = jnp.repeat(jnp.arange(NUM_GRAPHS, dtype=jnp.int32), half)

    out = discriminator_forward(kparams, x, edge_index, batch,
                                num_graphs=NUM_GRAPHS, tile_m=TILE_M)
    out = jax.block_until_ready(out)

    ref = discriminator_reference(params, x, edge_index, batch, NUM_GRAPHS)
    assert out.shape == (NUM_GRAPHS, 1)
    # bf16 matmul operands in the kernel vs f32 reference -> loose tolerance.
    assert jnp.allclose(out, ref, atol=2e-2, rtol=2e-2), (out, ref)

    print("KERNEL_OK")
</pallas_src>

<mosaic_0001>
module attributes {stable_mosaic.version = 11 : i64} {
  func.func @_head_kernel(%arg0: memref<2x16xf32, #tpu.memory_space<vmem>>, %arg1: memref<16x128xbf16, #tpu.memory_space<vmem>>, %arg2: memref<128x1xbf16, #tpu.memory_space<vmem>>, %arg3: memref<1x1xf32, #tpu.memory_space<vmem>>, %arg4: memref<2x1xf32, #tpu.memory_space<vmem>>) attributes {dimension_semantics = [], scalar_prefetch = 0 : i64, scratch_operands = 0 : i64, tpu.core_type = #tpu.core_type<tc>} {
    %c0 = arith.constant 0 : index
    %c0_0 = arith.constant 0 : index
    %0 = vector.load %arg1[%c0, %c0_0] : memref<16x128xbf16, #tpu.memory_space<vmem>>, vector<16x128xbf16>
    %c0_1 = arith.constant 0 : index
    %c0_2 = arith.constant 0 : index
    %1 = vector.load %arg2[%c0_1, %c0_2] : memref<128x1xbf16, #tpu.memory_space<vmem>>, vector<128x1xbf16>
    %cst = arith.constant dense<0.000000e+00> : vector<16x1xf32>
    %2 = tpu.matmul %0, %1, %cst {dimension_numbers = #tpu.dot_dimension_numbers<[1], [0], [0], [1], [0, 0, 1, 1], [], []>} : vector<16x128xbf16>, vector<128x1xbf16>, vector<16x1xf32> -> vector<16x1xf32>
    %c0_3 = arith.constant 0 : index
    %c0_4 = arith.constant 0 : index
    %3 = vector.load %arg0[%c0_3, %c0_4] : memref<2x16xf32, #tpu.memory_space<vmem>>, vector<2x16xf32>
    %cst_5 = arith.constant dense<0.000000e+00> : vector<2x1xf32>
    %4 = tpu.matmul %3, %2, %cst_5 {dimension_numbers = #tpu.dot_dimension_numbers<[1], [0], [0], [1], [0, 0, 1, 1], [], []>} : vector<2x16xf32>, vector<16x1xf32>, vector<2x1xf32> -> vector<2x1xf32>
    %c0_6 = arith.constant 0 : index
    %c0_7 = arith.constant 0 : index
    %5 = vector.load %arg3[%c0_6, %c0_7] : memref<1x1xf32, #tpu.memory_space<vmem>>, vector<1x1xf32>
    %6 = vector.broadcast %5 : vector<1x1xf32> to vector<2x1xf32>
    %7 = arith.addf %4, %6 : vector<2x1xf32>
    %8 = arith.negf %7 : vector<2x1xf32>
    %9 = math.exp %8 : vector<2x1xf32>
    %cst_8 = arith.constant 1.000000e+00 : f32
    %10 = vector.broadcast %cst_8 : f32 to vector<2x1xf32>
    %11 = arith.addf %10, %9 : vector<2x1xf32>
    %12 = arith.divf %10, %11 : vector<2x1xf32>
    %c0_9 = arith.constant 0 : index
    %c0_10 = arith.constant 0 : index
    %13 = vector.load %arg4[%c0_9, %c0_10] : memref<2x1xf32, #tpu.memory_space<vmem>>, vector<2x1xf32>
    tpu.vector_store %arg4[%c0_9, %c0_10], %12 {strides = array<i32>} : memref<2x1xf32, #tpu.memory_space<vmem>>, vector<2x1xf32>,
    return
  }
}

module attributes {stable_mosaic.version = 11 : i64} {
  func.func @_gin_layer_kernel(%arg0: i32, %arg1: memref<8x16xbf16, #tpu.memory_space<vmem>>, %arg2: memref<16x128xbf16, #tpu.memory_space<vmem>>, %arg3: memref<8x128xbf16, #tpu.memory_space<vmem>>, %arg4: memref<128x128xbf16, #tpu.memory_space<vmem>>, %arg5: memref<1x128xf32, #tpu.memory_space<vmem>>, %arg6: memref<128x128xbf16, #tpu.memory_space<vmem>>, %arg7: memref<1x128xf32, #tpu.memory_space<vmem>>, %arg8: memref<8x128xbf16, #tpu.memory_space<vmem>>) attributes {dimension_semantics = [#tpu.dimension_semantics<parallel>], iteration_bounds = array<i64: 2>, scalar_prefetch = 0 : i64, scratch_operands = 0 : i64, tpu.core_type = #tpu.core_type<tc>, window_params = [{transform_indices = @transform_0, window_bounds = array<i64: 8, 16>}, {pipeline_mode = #tpu.pipeline_mode<synchronous>, transform_indices = @transform_1, window_bounds = array<i64: 16, 128>}, {transform_indices = @transform_2, window_bounds = array<i64: 8, 128>}, {pipeline_mode = #tpu.pipeline_mode<synchronous>, transform_indices = @transform_3, window_bounds = array<i64: 128, 128>}, {pipeline_mode = #tpu.pipeline_mode<synchronous>, transform_indices = @transform_4, window_bounds = array<i64: 1, 128>}, {pipeline_mode = #tpu.pipeline_mode<synchronous>, transform_indices = @transform_5, window_bounds = array<i64: 128, 128>}, {pipeline_mode = #tpu.pipeline_mode<synchronous>, transform_indices = @transform_6, window_bounds = array<i64: 1, 128>}, {transform_indices = @transform_7, window_bounds = array<i64: 8, 128>}]} {
    %c0 = arith.constant 0 : index
    %c0_0 = arith.constant 0 : index
    %0 = vector.load %arg3[%c0, %c0_0] : memref<8x128xbf16, #tpu.memory_space<vmem>>, vector<8x128xbf16>
    %1 = arith.extf %0 : vector<8x128xbf16> to vector<8x128xf32>
    %c0_1 = arith.constant 0 : index
    %c0_2 = arith.constant 0 : index
    %2 = vector.load %arg1[%c0_1, %c0_2] : memref<8x16xbf16, #tpu.memory_space<vmem>>, vector<8x16xbf16>
    %c0_3 = arith.constant 0 : index
    %c0_4 = arith.constant 0 : index
    %3 = vector.load %arg2[%c0_3, %c0_4] : memref<16x128xbf16, #tpu.memory_space<vmem>>, vector<16x128xbf16>
    %cst = arith.constant dense<0.000000e+00> : vector<8x128xf32>
    %4 = tpu.matmul %2, %3, %cst {dimension_numbers = #tpu.dot_dimension_numbers<[1], [0], [0], [1], [0, 0, 1, 1], [], []>} : vector<8x16xbf16>, vector<16x128xbf16>, vector<8x128xf32> -> vector<8x128xf32>
    %5 = arith.addf %1, %4 : vector<8x128xf32>
    %6 = arith.truncf %5 : vector<8x128xf32> to vector<8x128xbf16>
    %c0_5 = arith.constant 0 : index
    %c0_6 = arith.constant 0 : index
    %7 = vector.load %arg4[%c0_5, %c0_6] : memref<128x128xbf16, #tpu.memory_space<vmem>>, vector<128x128xbf16>
    %cst_7 = arith.constant dense<0.000000e+00> : vector<8x128xf32>
    %8 = tpu.matmul %6, %7, %cst_7 {dimension_numbers = #tpu.dot_dimension_numbers<[1], [0], [0], [1], [0, 0, 1, 1], [], []>} : vector<8x128xbf16>, vector<128x128xbf16>, vector<8x128xf32> -> vector<8x128xf32>
    %c0_8 = arith.constant 0 : index
    %c0_9 = arith.constant 0 : index
    %9 = vector.load %arg5[%c0_8, %c0_9] : memref<1x128xf32, #tpu.memory_space<vmem>>, vector<1x128xf32>
    %10 = vector.broadcast %9 : vector<1x128xf32> to vector<8x128xf32>
    %11 = arith.addf %8, %10 : vector<8x128xf32>
    %cst_10 = arith.constant 0.000000e+00 : f32
    %12 = vector.broadcast %cst_10 : f32 to vector<8x128xf32>
    %13 = arith.maximumf %11, %12 : vector<8x128xf32>
    %14 = arith.truncf %13 : vector<8x128xf32> to vector<8x128xbf16>
    %c0_11 = arith.constant 0 : index
    %c0_12 = arith.constant 0 : index
    %15 = vector.load %arg6[%c0_11, %c0_12] : memref<128x128xbf16, #tpu.memory_space<vmem>>, vector<128x128xbf16>
    %cst_13 = arith.constant dense<0.000000e+00> : vector<8x128xf32>
    %16 = tpu.matmul %14, %15, %cst_13 {dimension_numbers = #tpu.dot_dimension_numbers<[1], [0], [0], [1], [0, 0, 1, 1], [], []>} : vector<8x128xbf16>, vector<128x128xbf16>, vector<8x128xf32> -> vector<8x128xf32>
    %c0_14 = arith.constant 0 : index
    %c0_15 = arith.constant 0 : index
    %17 = vector.load %arg7[%c0_14, %c0_15] : memref<1x128xf32, #tpu.memory_space<vmem>>, vector<1x128xf32>
    %18 = vector.broadcast %17 : vector<1x128xf32> to vector<8x128xf32>
    %19 = arith.addf %16, %18 : vector<8x128xf32>
    %20 = arith.truncf %19 : vector<8x128xf32> to vector<8x128xbf16>
    %c0_16 = arith.constant 0 : index
    %c0_17 = arith.constant 0 : index
    %21 = vector.load %arg8[%c0_16, %c0_17] : memref<8x128xbf16, #tpu.memory_space<vmem>>, vector<8x128xbf16>
    tpu.vector_store %arg8[%c0_16, %c0_17], %20 {strides = array<i32>} : memref<8x128xbf16, #tpu.memory_space<vmem>>, vector<8x128xbf16>,
    return
  }
  func.func @transform_0(%arg0: i32) -> (i32, i32) {
    %c0_i32 = arith.constant 0 : i32
    %c0_i32_0 = arith.constant 0 : i32
    return %arg0, %c0_i32 : i32, i32
  }
  func.func @transform_1(%arg0: i32) -> (i32, i32) {
    %c0_i32 = arith.constant 0 : i32
    %c0_i32_0 = arith.constant 0 : i32
    %c0_i32_1 = arith.constant 0 : i32
    return %c0_i32, %c0_i32_0 : i32, i32
  }
  func.func @transform_2(%arg0: i32) -> (i32, i32) {
    %c0_i32 = arith.constant 0 : i32
    %c0_i32_0 = arith.constant 0 : i32
    return %arg0, %c0_i32 : i32, i32
  }
  func.func @transform_3(%arg0: i32) -> (i32, i32) {
    %c0_i32 = arith.constant 0 : i32
    %c0_i32_0 = arith.constant 0 : i32
    %c0_i32_1 = arith.constant 0 : i32
    return %c0_i32, %c0_i32_0 : i32, i32
  }
  func.func @transform_4(%arg0: i32) -> (i32, i32) {
    %c0_i32 = arith.constant 0 : i32
    %c0_i32_0 = arith.constant 0 : i32
    %c0_i32_1 = arith.constant 0 : i32
    return %c0_i32, %c0_i32_0 : i32, i32
  }
  func.func @transform_5(%arg0: i32) -> (i32, i32) {
    %c0_i32 = arith.constant 0 : i32
    %c0_i32_0 = arith.constant 0 : i32
    %c0_i32_1 = arith.constant 0 : i32
    return %c0_i32, %c0_i32_0 : i32, i32
  }
  func.func @transform_6(%arg0: i32) -> (i32, i32) {
    %c0_i32 = arith.constant 0 : i32
    %c0_i32_0 = arith.constant 0 : i32
    %c0_i32_1 = arith.constant 0 : i32
    return %c0_i32, %c0_i32_0 : i32, i32
  }
  func.func @transform_7(%arg0: i32) -> (i32, i32) {
    %c0_i32 = arith.constant 0 : i32
    %c0_i32_0 = arith.constant 0 : i32
    return %arg0, %c0_i32 : i32, i32
  }
}

</mosaic_0001>

<llo_original>
// kernel: discriminator_forward.7
$region0: #{discriminator_forward.7}
  #allocation0 [shape = 'u32[]', space=smem, size = 0x4, offset = 0x4, fixed_abs, tag = 'smem constant byte address 0x4 - core index']
  #allocation1 [shape = 'u32[144,128]{1,0:T(1,128)}', space=vmem, size = 0x12000, scoped, tag = 'internal scratch']
  #allocation2 [shape = 'f32[1,1]{1,0:T(1,128)S(1)}', space=vmem, size = 0x200, scoped, tag = 'scoped memory for discriminator_forward.7']
  %s0 = inlined_call_operand.vmem [shape: f32[2,16], index: 0, kind: input, shape index: {}]
  %s1 = inlined_call_operand.vmem [shape: bf16[16,128], index: 1, kind: input, shape index: {}]
  %s2 = inlined_call_operand.vmem [shape: bf16[128,1], index: 2, kind: input, shape index: {}]
  %s3 = inlined_call_operand.<no memory space> [shape: f32[1,1], index: 3, kind: input, shape index: {}]
  %s4 = inlined_call_operand.vmem [shape: f32[2,1], index: 4, kind: output, shape index: {}]
  %s5 = sld [smem:[#allocation0]]
  $region26: #{discriminator_forward.7} parent=0
    _
  %s7 = ssub.s32 1, %s5
  %s8 = scalar_select 0, %s7, %s5
  %v9 = vstv %s3
  %10 = vst [vmem:[#allocation2] sm:$0x1] %v9
  // Predicated region
  $region2: #{discriminator_forward.7} parent=0 // pred_check
    _
  $region3: #{discriminator_forward.7} parent=0 // pred_check_branch
    %12 = sbr.rel (0) target = $region5
  $region4: #{discriminator_forward.7} parent=0 // pred_region
    _
  $region5: #{discriminator_forward.7} parent=0 // pred_fallthru
    _
  // Predicated region
  $region6: #{discriminator_forward.7} parent=0 // pred_check
    _
  $region7: #{discriminator_forward.7} parent=0 // pred_check_branch
    %14 = sbr.rel (0) target = $region9
  $region8: #{discriminator_forward.7} parent=0 // pred_region
    _
  $region9: #{discriminator_forward.7} parent=0 // pred_fallthru
    _
  // Predicated region
  $region10: #{discriminator_forward.7} parent=0 // pred_check
    _
  $region11: #{discriminator_forward.7} parent=0 // pred_check_branch
    %16 = sbr.rel (0) target = $region13
  $region12: #{discriminator_forward.7} parent=0 // pred_region
    _
  $region13: #{discriminator_forward.7} parent=0 // pred_fallthru
    _
  // Predicated region
  $region14: #{discriminator_forward.7} parent=0 // pred_check
    _
  $region15: #{discriminator_forward.7} parent=0 // pred_check_branch
    %18 = sbr.rel (0) target = $region17
  $region16: #{discriminator_forward.7} parent=0 // pred_region
    _
  $region17: #{discriminator_forward.7} parent=0 // pred_fallthru
    _
  %v20 = vld [vmem:[%s1] sm:$0xf]
  %v21 = vld [vmem:[%s1 + $0x4] sm:$0xf]
  %v22 = vld [vmem:[%s2] sm:$0xf]
  %v23 = vld [vmem:[%s2 + $0x4] sm:$0xf]
  %v24 = vld [vmem:[%s2 + $0x8] sm:$0xf]
  %v25 = vld [vmem:[%s2 + $0xc] sm:$0xf]
  %v26 = vld [vmem:[%s2 + $0x10] sm:$0xf]
  %v27 = vld [vmem:[%s2 + $0x14] sm:$0xf]
  %v28 = vld [vmem:[%s2 + $0x18] sm:$0xf]
  %v29 = vld [vmem:[%s2 + $0x1c] sm:$0xf]
  %v30 = vld [vmem:[%s2 + $0x20] sm:$0xf]
  %v31 = vld [vmem:[%s2 + $0x24] sm:$0xf]
  %v32 = vld [vmem:[%s2 + $0x28] sm:$0xf]
  %v33 = vld [vmem:[%s2 + $0x2c] sm:$0xf]
  %v34 = vld [vmem:[%s2 + $0x30] sm:$0xf]
  %v35 = vld [vmem:[%s2 + $0x34] sm:$0xf]
  %v36 = vld [vmem:[%s2 + $0x38] sm:$0xf]
  %v37 = vld [vmem:[%s2 + $0x3c] sm:$0xf]
  %v40 = vunpack.c.l.b16 %v20
  %v41 = vunpack.c.l.b16 %v21
  %v42 = vpack.c.b16 %v41, %v40
  %v60 = vunpack.c.l.b16 %v22
  %v61 = vunpack.c.l.b16 %v23
  %v62 = vunpack.c.l.b16 %v24
  %v63 = vunpack.c.l.b16 %v25
  %v64 = vunpack.c.l.b16 %v26
  %v65 = vunpack.c.l.b16 %v27
  %v66 = vunpack.c.l.b16 %v28
  %v67 = vunpack.c.l.b16 %v29
  %v68 = vunpack.c.l.b16 %v30
  %v69 = vunpack.c.l.b16 %v31
  %v70 = vunpack.c.l.b16 %v32
  %v71 = vunpack.c.l.b16 %v33
  %v72 = vunpack.c.l.b16 %v34
  %v73 = vunpack.c.l.b16 %v35
  %v74 = vunpack.c.l.b16 %v36
  %v75 = vunpack.c.l.b16 %v37
  %v76 = vpack.c.b16 %v61, %v60
  %v77 = vpack.c.b16 %v63, %v62
  %v78 = vpack.c.b16 %v65, %v64
  %v79 = vpack.c.b16 %v67, %v66
  %v80 = vpack.c.b16 %v69, %v68
  %v81 = vpack.c.b16 %v71, %v70
  %v82 = vpack.c.b16 %v73, %v72
  %v83 = vpack.c.b16 %v75, %v74
  %92 = vmatprep.subr.bf16.mxu0 0
  %93 = vmatpush1.bf16.msra.mxu0 %v83
  %94 = vmatprep.subr.bf16.mxu0 0
  %95 = vmatpush1.bf16.msra.mxu0 %v82
  %96 = vmatprep.subr.bf16.mxu0 0
  %97 = vmatpush1.bf16.msra.mxu0 %v81
  %98 = vmatprep.subr.bf16.mxu0 0
  %99 = vmatpush1.bf16.msra.mxu0 %v80
  %100 = vmatprep.subr.bf16.mxu0 0
  %101 = vmatpush1.bf16.msra.mxu0 %v79
  %102 = vmatprep.subr.bf16.mxu0 0
  %103 = vmatpush1.bf16.msra.mxu0 %v78
  %104 = vmatprep.subr.bf16.mxu0 0
  %105 = vmatpush1.bf16.msra.mxu0 %v77
  %106 = vmatprep.subr.bf16.mxu0 0
  %107 = vmatpush1.bf16.msra.mxu0 %v76
  %108 = vmatprep.subr.bf16.mxu0 0
  %109 = vmatpush2.bf16.msra.mxu0 0
  %110 = vmatprep.subr.bf16.mxu0 0
  %111 = vmatpush2.bf16.msra.mxu0 0
  %112 = vmatprep.subr.bf16.mxu0 0
  %113 = vmatpush2.bf16.msra.mxu0 0
  %114 = vmatprep.subr.bf16.mxu0 0
  %115 = vmatpush2.bf16.msra.mxu0 0
  %116 = vmatprep.subr.bf16.mxu0 0
  %117 = vmatpush2.bf16.msra.mxu0 0
  %118 = vmatprep.subr.bf16.mxu0 0
  %119 = vmatpush2.bf16.msra.mxu0 0
  %120 = vmatprep.subr.bf16.mxu0 0
  %121 = vmatpush2.bf16.msra.mxu0 0
  %122 = vmatprep.subr.bf16.mxu0 0
  %123 = vmatpush2.bf16.msra.mxu0 0
  %124 = vmatprep.mubr.bf16.mxu0 0
  %125 = vmatmul.mubr.bf16.gmra.mxu0 %v42
  %v126 = vpop.f32.mrf.mxu0
  %v127 = vadd.f32 0.0, %v126
  %v128 = vpop.f32.mrf.mxu0
  %v129 = vpop.f32.mrf.mxu0
  %v130 = vadd.f32 0.0, %v129
  %v131 = vpop.f32.mrf.mxu0
  %132 = vdwg.mxu0
  %v133 = vld [vmem:[%s0] sm:$0x3]
  %v134 = vld [vmem:[#allocation2] sm:$0x1]
  %v136 = vlaneseq
  %v137 = vshrl.u32 %v136, 7
  %v138 = vsub.s32 0, %v137
  %v139 = vrot.slane %v134, %v138
  %vm141 = vcmask 130048
  %v143 = vsel %vm141, %v133, 0
  %145 = vmatprep.subr.mxu0 0.0
  %146 = vmatpush1.msra.mxu0 0.0
  %147 = vmatprep.subr.mxu0 0.0
  %148 = vmatpush1.msra.mxu0 0.0
  %149 = vmatprep.subr.mxu0 0.0
  %150 = vmatpush1.msra.mxu0 0.0
  %151 = vmatprep.subr.mxu0 0.0
  %152 = vmatpush1.msra.mxu0 0.0
  %153 = vmatprep.subr.mxu0 0.0
  %154 = vmatpush1.msra.mxu0 0.0
  %155 = vmatprep.subr.mxu0 0.0
  %156 = vmatpush1.msra.mxu0 0.0
  %157 = vmatprep.subr.mxu0 0.0
  %158 = vmatpush1.msra.mxu0 0.0
  %159 = vmatprep.subr.mxu0 0.0
  %160 = vmatpush1.msra.mxu0 0.0
  %161 = vmatprep.subr.mxu0 0.0
  %162 = vmatpush1.msra.mxu0 0.0
  %163 = vmatprep.subr.mxu0 0.0
  %164 = vmatpush1.msra.mxu0 0.0
  %165 = vmatprep.subr.mxu0 0.0
  %166 = vmatpush1.msra.mxu0 0.0
  %167 = vmatprep.subr.mxu0 0.0
  %168 = vmatpush1.msra.mxu0 0.0
  %169 = vmatprep.subr.mxu0 0.0
  %170 = vmatpush1.msra.mxu0 0.0
  %171 = vmatprep.subr.mxu0 0.0
  %172 = vmatpush1.msra.mxu0 0.0
  %173 = vmatprep.subr.mxu0 0.0
  %174 = vmatpush1.msra.mxu0 %v130
  %175 = vmatprep.subr.mxu0 0.0
  %176 = vmatpush1.msra.mxu0 %v127
  %177 = vmatprep.subr.mxu0 0.0
  %178 = vmatpush2.msra.mxu0 0.0
  %179 = vmatprep.subr.mxu0 0.0
  %180 = vmatpush2.msra.mxu0 0.0
  %181 = vmatprep.subr.mxu0 0.0
  %182 = vmatpush2.msra.mxu0 0.0
  %183 = vmatprep.subr.mxu0 0.0
  %184 = vmatpush2.msra.mxu0 0.0
  %185 = vmatprep.subr.mxu0 0.0
  %186 = vmatpush2.msra.mxu0 0.0
  %187 = vmatprep.subr.mxu0 0.0
  %188 = vmatpush2.msra.mxu0 0.0
  %189 = vmatprep.subr.mxu0 0.0
  %190 = vmatpush2.msra.mxu0 0.0
  %191 = vmatprep.subr.mxu0 0.0
  %192 = vmatpush2.msra.mxu0 0.0
  %193 = vmatprep.subr.mxu0 0.0
  %194 = vmatpush2.msra.mxu0 0.0
  %195 = vmatprep.subr.mxu0 0.0
  %196 = vmatpush2.msra.mxu0 0.0
  %197 = vmatprep.subr.mxu0 0.0
  %198 = vmatpush2.msra.mxu0 0.0
  %199 = vmatprep.subr.mxu0 0.0
  %200 = vmatpush2.msra.mxu0 0.0
  %201 = vmatprep.subr.mxu0 0.0
  %202 = vmatpush2.msra.mxu0 0.0
  %203 = vmatprep.subr.mxu0 0.0
  %204 = vmatpush2.msra.mxu0 0.0
  %205 = vmatprep.subr.mxu0 0.0
  %206 = vmatpush2.msra.mxu0 0.0
  %207 = vmatprep.subr.mxu0 0.0
  %208 = vmatpush2.msra.mxu0 0.0
  %209 = vmatprep.mubr.f32.mxu0 0.0
  %210 = vmatmul.mubr.f32.gmra.mxu0 %v143
  %v211 = vpop.f32.mrf.mxu0
  %v212 = vadd.f32 %v139, %v211
  %v213 = vpop.f32.mrf.mxu0
  %214 = vdwg.mxu0
  %v215 = vxor.u32 %v212, 2147483648
  %v216 = vmul.f32 %v215, 1.442695
  %v217 = vpow.pop %v216
  %v218 = vadd.f32 %v217, 1.0
  %v219 = vrcp.pop %v218
  %v220 = vmul.f32 1.0, %v219
  %vm221 = vcmask 1024
  %222 = vst.msk [vmem:[%s4] sm:$0x3] %vm221, %v220
  // Predicated region
  $region18: #{discriminator_forward.7} parent=0 // pred_check
    _
  $region19: #{discriminator_forward.7} parent=0 // pred_check_branch
    %224 = sbr.rel (0) target = $region21
  $region20: #{discriminator_forward.7} parent=0 // pred_region
    _
  $region21: #{discriminator_forward.7} parent=0 // pred_fallthru
    _
  // Predicated region
  $region22: #{discriminator_forward.7} parent=0 // pred_check
    _
  $region23: #{discriminator_forward.7} parent=0 // pred_check_branch
    %226 = sbr.rel (0) target = $region25
  $region24: #{discriminator_forward.7} parent=0 // pred_region
    _
  $region25: #{discriminator_forward.7} parent=0 // pred_fallthru
    _

// kernel: discriminator_forward.4
$region0: #{discriminator_forward.4}
  #allocation0 [shape = 'u32[]', space=smem, size = 0x4, offset = 0x4, fixed_abs, tag = 'smem constant byte address 0x4 - core index']
  #allocation1 [shape = 'u32[144,128]{1,0:T(1,128)}', space=vmem, size = 0x12000, scoped, tag = 'internal scratch']
  %s0 = inlined_call_operand.vmem [shape: bf16[16,16], index: 0, kind: input, shape index: {}]
  %s1 = inlined_call_operand.vmem [shape: bf16[16,128], index: 1, kind: input, shape index: {}, may-alias: {1,2}]
  %s2 = inlined_call_operand.vmem [shape: bf16[16,128], index: 2, kind: input, shape index: {}, may-alias: {1,2}]
  %s3 = inlined_call_operand.vmem [shape: bf16[128,128], index: 3, kind: input, shape index: {}]
  %s4 = inlined_call_operand.vmem [shape: f32[1,128], index: 4, kind: input, shape index: {}]
  %s5 = inlined_call_operand.vmem [shape: bf16[128,128], index: 5, kind: input, shape index: {}]
  %s6 = inlined_call_operand.vmem [shape: f32[1,128], index: 6, kind: input, shape index: {}]
  %s7 = inlined_call_operand.vmem [shape: bf16[16,128], index: 7, kind: output, shape index: {}]
  %s8 = sld [smem:[#allocation0]]
  $region61: #{discriminator_forward.4} parent=0
    _
  %s10 = ssub.s32 1, %s8
  %s11 = scalar_select 0, %s10, %s8
  loop: start=0, step=1, limit=4
  $region2: #{discriminator_forward.4} parent=0 // loop_pre_header
    _
  $region3: #{discriminator_forward.4} parent=0 // loop_header
    %s13 = sphi 0, %s17
    %p14 = scmp.ge.s32.totalorder %s13, 4
    %s23 = sphi 0, %s25
    %s26 = sphi 0, %s23
    %s27 = sphi 0, %s26
    %s43 = sphi 0, %s27
    %s47 = sphi 0, %s47
    %s49 = sphi 0, %s47
    %s50 = sphi 0, %s49
    %s64 = sphi 0, %s50
    %s70 = sphi 0, %s72
    %s73 = sphi 0, %s70
    %s74 = sphi 0, %s73
    %s90 = sphi 0, %s74
    %s94 = sphi 0, %s94
    %s96 = sphi 0, %s94
    %s97 = sphi 0, %s96
    %s111 = sphi 0, %s97
    %s115 = sphi 0, %s115
    %s117 = sphi 0, %s115
    %s118 = sphi 0, %s117
    %s132 = sphi 0, %s118
    %s136 = sphi 0, %s136
    %s138 = sphi 0, %s136
    %s139 = sphi 0, %s138
    %s153 = sphi 0, %s139
    %s157 = sphi 0, %s157
    %s159 = sphi 0, %s157
    %s160 = sphi 0, %s159
    %s174 = sphi 0, %s160
    %s180 = sphi 0, %s182
    %s183 = sphi 0, %s180
    %s184 = sphi 0, %s183
    %s200 = sphi 0, %s184
  $region4: #{discriminator_forward.4} parent=0 // loop_header_branch
    %16 = sbr.rel (%p14) target = $region8
  $region5: #{discriminator_forward.4} parent=0 // loop_body
    %s18 = ssub.s32 %s13, 1
    %s19 = ssub.s32 %s13, 2
    %s20 = sadd.s32 %s13, 1
    %s21 = ssub.s32 %s13, %s20
    %p22 = scmp.eq.s32.totalorder %s21, 0
    %s24 = sadd.s32 %s23, 1
    %s25 = scalar_select %p22, %s23, %s24
    %p28 = pneg %p22
    %p29 = scmp.eq.s32.totalorder %s13, 1
    %p30 = por %p28, %p29
    %p31 = scmp.ne.s32.totalorder %s23, %s26
    %p32 = scmp.eq.s32.totalorder %s13, 0
    %p33 = por %p31, %p32
    %p34 = scmp.ne.s32.totalorder %s23, %s26
    %p35 = scmp.eq.s32.totalorder %s18, 1
    %p36 = por %p34, %p35
    %p37 = scmp.ne.s32.totalorder %s26, %s27
    %p38 = scmp.eq.s32.totalorder %s18, 0
    %p39 = por %p37, %p38
    %p40 = scmp.ne.s32.totalorder %s26, %s27
    %p41 = scmp.eq.s32.totalorder %s19, 1
    %p42 = por %p40, %p41
    %p44 = scmp.ne.s32.totalorder %s27, %s43
    %p45 = scmp.eq.s32.totalorder %s19, 0
    %p46 = por %p44, %p45
    %s48 = sadd.s32 %s47, 1
    %p51 = scmp.eq.s32.totalorder %s13, 1
    %p52 = scmp.ne.s32.totalorder %s47, %s49
    %p53 = scmp.eq.s32.totalorder %s13, 0
    %p54 = por %p52, %p53
    %p55 = scmp.ne.s32.totalorder %s47, %s49
    %p56 = scmp.eq.s32.totalorder %s18, 1
    %p57 = por %p55, %p56
    %p58 = scmp.ne.s32.totalorder %s49, %s50
    %p59 = scmp.eq.s32.totalorder %s18, 0
    %p60 = por %p58, %p59
    %p61 = scmp.ne.s32.totalorder %s49, %s50
    %p62 = scmp.eq.s32.totalorder %s19, 1
    %p63 = por %p61, %p62
    %p65 = scmp.ne.s32.totalorder %s50, %s64
    %p66 = scmp.eq.s32.totalorder %s19, 0
    %p67 = por %p65, %p66
    %s68 = ssub.s32 %s13, %s20
    %p69 = scmp.eq.s32.totalorder %s68, 0
    %s71 = sadd.s32 %s70, 1
    %s72 = scalar_select %p69, %s70, %s71
    %p75 = pneg %p69
    %p76 = scmp.eq.s32.totalorder %s13, 1
    %p77 = por %p75, %p76
    %p78 = scmp.ne.s32.totalorder %s70, %s73
    %p79 = scmp.eq.s32.totalorder %s13, 0
    %p80 = por %p78, %p79
    %p81 = scmp.ne.s32.totalorder %s70, %s73
    %p82 = scmp.eq.s32.totalorder %s18, 1
    %p83 = por %p81, %p82
    %p84 = scmp.ne.s32.totalorder %s73, %s74
    %p85 = scmp.eq.s32.totalorder %s18, 0
    %p86 = por %p84, %p85
    %p87 = scmp.ne.s32.totalorder %s73, %s74
    %p88 = scmp.eq.s32.totalorder %s19, 1
    %p89 = por %p87, %p88
    %p91 = scmp.ne.s32.totalorder %s74, %s90
    %p92 = scmp.eq.s32.totalorder %s19, 0
    %p93 = por %p91, %p92
    %s95 = sadd.s32 %s94, 1
    %p98 = scmp.eq.s32.totalorder %s13, 1
    %p99 = scmp.ne.s32.totalorder %s94, %s96
    %p100 = scmp.eq.s32.totalorder %s13, 0
    %p101 = por %p99, %p100
    %p102 = scmp.ne.s32.totalorder %s94, %s96
    %p103 = scmp.eq.s32.totalorder %s18, 1
    %p104 = por %p102, %p103
    %p105 = scmp.ne.s32.totalorder %s96, %s97
    %p106 = scmp.eq.s32.totalorder %s18, 0
    %p107 = por %p105, %p106
    %p108 = scmp.ne.s32.totalorder %s96, %s97
    %p109 = scmp.eq.s32.totalorder %s19, 1
    %p110 = por %p108, %p109
    %p112 = scmp.ne.s32.totalorder %s97, %s111
    %p113 = scmp.eq.s32.totalorder %s19, 0
    %p114 = por %p112, %p113
    %s116 = sadd.s32 %s115, 1
    %p119 = scmp.eq.s32.totalorder %s13, 1
    %p120 = scmp.ne.s32.totalorder %s115, %s117
    %p121 = scmp.eq.s32.totalorder %s13, 0
    %p122 = por %p120, %p121
    %p123 = scmp.ne.s32.totalorder %s115, %s117
    %p124 = scmp.eq.s32.totalorder %s18, 1
    %p125 = por %p123, %p124
    %p126 = scmp.ne.s32.totalorder %s117, %s118
    %p127 = scmp.eq.s32.totalorder %s18, 0
    %p128 = por %p126, %p127
    %p129 = scmp.ne.s32.totalorder %s117, %s118
    %p130 = scmp.eq.s32.totalorder %s19, 1
    %p131 = por %p129, %p130
    %p133 = scmp.ne.s32.totalorder %s118, %s132
    %p134 = scmp.eq.s32.totalorder %s19, 0
    %p135 = por %p133, %p134
    %s137 = sadd.s32 %s136, 1
    %p140 = scmp.eq.s32.totalorder %s13, 1
    %p141 = scmp.ne.s32.totalorder %s136, %s138
    %p142 = scmp.eq.s32.totalorder %s13, 0
    %p143 = por %p141, %p142
    %p144 = scmp.ne.s32.totalorder %s136, %s138
    %p145 = scmp.eq.s32.totalorder %s18, 1
    %p146 = por %p144, %p145
    %p147 = scmp.ne.s32.totalorder %s138, %s139
    %p148 = scmp.eq.s32.totalorder %s18, 0
    %p149 = por %p147, %p148
    %p150 = scmp.ne.s32.totalorder %s138, %s139
    %p151 = scmp.eq.s32.totalorder %s19, 1
    %p152 = por %p150, %p151
    %p154 = scmp.ne.s32.totalorder %s139, %s153
    %p155 = scmp.eq.s32.totalorder %s19, 0
    %p156 = por %p154, %p155
    %s158 = sadd.s32 %s157, 1
    %p161 = scmp.eq.s32.totalorder %s13, 1
    %p162 = scmp.ne.s32.totalorder %s157, %s159
    %p163 = scmp.eq.s32.totalorder %s13, 0
    %p164 = por %p162, %p163
    %p165 = scmp.ne.s32.totalorder %s157, %s159
    %p166 = scmp.eq.s32.totalorder %s18, 1
    %p167 = por %p165, %p166
    %p168 = scmp.ne.s32.totalorder %s159, %s160
    %p169 = scmp.eq.s32.totalorder %s18, 0
    %p170 = por %p168, %p169
    %p171 = scmp.ne.s32.totalorder %s159, %s160
    %p172 = scmp.eq.s32.totalorder %s19, 1
    %p173 = por %p171, %p172
    %p175 = scmp.ne.s32.totalorder %s160, %s174
    %p176 = scmp.eq.s32.totalorder %s19, 0
    %p177 = por %p175, %p176
    %s178 = ssub.s32 %s13, %s20
    %p179 = scmp.eq.s32.totalorder %s178, 0
    %s181 = sadd.s32 %s180, 1
    %s182 = scalar_select %p179, %s180, %s181
    %p185 = pneg %p179
    %p186 = scmp.eq.s32.totalorder %s13, 1
    %p187 = por %p185, %p186
    %p188 = scmp.ne.s32.totalorder %s180, %s183
    %p189 = scmp.eq.s32.totalorder %s13, 0
    %p190 = por %p188, %p189
    %p191 = scmp.ne.s32.totalorder %s180, %s183
    %p192 = scmp.eq.s32.totalorder %s18, 1
    %p193 = por %p191, %p192
    %p194 = scmp.ne.s32.totalorder %s183, %s184
    %p195 = scmp.eq.s32.totalorder %s18, 0
    %p196 = por %p194, %p195
    %p197 = scmp.ne.s32.totalorder %s183, %s184
    %p198 = scmp.eq.s32.totalorder %s19, 1
    %p199 = por %p197, %p198
    %p201 = scmp.ne.s32.totalorder %s184, %s200
    %p202 = scmp.eq.s32.totalorder %s19, 0
    %p203 = por %p201, %p202
    %p204 = scmp.le.s32.totalorder 1, %s13
    %p205 = scmp.lt.s32.totalorder %s13, 3
    %p206 = pnand %p204, %p205
    %p207 = pneg %p206
    // Predicated region
    $region9: #{discriminator_forward.4} parent=5 // pred_check
      _
    $region10: #{discriminator_forward.4} parent=5 // pred_check_branch
      %209 = sbr.rel (%p206) target = $region12
    $region11: #{discriminator_forward.4} parent=5 // pred_region
      %s210 = ssub.s32 %s13, 1
      // Predicated region
      $region13: #{discriminator_forward.4} parent=11 // pred_check
        %p211 = pneg %p60
      $region14: #{discriminator_forward.4} parent=11 // pred_check_branch
        %213 = sbr.rel (%p211) target = $region16
      $region15: #{discriminator_forward.4} parent=11 // pred_region
        _
      $region16: #{discriminator_forward.4} parent=11 // pred_fallthru
        _
      // Predicated region
      $region17: #{discriminator_forward.4} parent=11 // pred_check
        %p214 = pneg %p107
      $region18: #{discriminator_forward.4} parent=11 // pred_check_branch
        %216 = sbr.rel (%p214) target = $region20
      $region19: #{discriminator_forward.4} parent=11 // pred_region
        _
      $region20: #{discriminator_forward.4} parent=11 // pred_fallthru
        _
      // Predicated region
      $region21: #{discriminator_forward.4} parent=11 // pred_check
        %p217 = pneg %p128
      $region22: #{discriminator_forward.4} parent=11 // pred_check_branch
        %219 = sbr.rel (%p217) target = $region24
      $region23: #{discriminator_forward.4} parent=11 // pred_region
        _
      $region24: #{discriminator_forward.4} parent=11 // pred_fallthru
        _
      // Predicated region
      $region25: #{discriminator_forward.4} parent=11 // pred_check
        %p220 = pneg %p149
      $region26: #{discriminator_forward.4} parent=11 // pred_check_branch
        %222 = sbr.rel (%p220) target = $region28
      $region27: #{discriminator_forward.4} parent=11 // pred_region
        _
      $region28: #{discriminator_forward.4} parent=11 // pred_fallthru
        _
      // Predicated region
      $region29: #{discriminator_forward.4} parent=11 // pred_check
        %p223 = pneg %p170
      $region30: #{discriminator_forward.4} parent=11 // pred_check_branch
        %225 = sbr.rel (%p223) target = $region32
      $region31: #{discriminator_forward.4} parent=11 // pred_region
        _
      $region32: #{discriminator_forward.4} parent=11 // pred_fallthru
        _
    $region12: #{discriminator_forward.4} parent=5 // pred_fallthru
      _
    %p226 = scmp.lt.s32.totalorder %s13, 2
    // Predicated region
    $region33: #{discriminator_forward.4} parent=5 // pred_check
      %p227 = pneg %p226
    $region34: #{discriminator_forward.4} parent=5 // pred_check_branch
      %229 = sbr.rel (%p227) target = $region36
    $region35: #{discriminator_forward.4} parent=5 // pred_region
      // Predicated region
      $region37: #{discriminator_forward.4} parent=35 // pred_check
        %p230 = pneg %p33
      $region38: #{discriminator_forward.4} parent=35 // pred_check_branch
        %232 = sbr.rel (%p230) target = $region40
      $region39: #{discriminator_forward.4} parent=35 // pred_region
        %p233 = scmp.lt.s32.totalorder %s13, 1
        %s234 = scalar_select %p233, %s13, 1
        %s235 = smul.addr %s234, 4
        %s236 = scalar_lea.vmem %s0, %s235
      $region40: #{discriminator_forward.4} parent=35 // pred_fallthru
        _
      // Predicated region
      $region41: #{discriminator_forward.4} parent=35 // pred_check
        %p237 = pneg %p80
      $region42: #{discriminator_forward.4} parent=35 // pred_check_branch
        %239 = sbr.rel (%p237) target = $region44
      $region43: #{discriminator_forward.4} parent=35 // pred_region
        %p240 = scmp.lt.s32.totalorder %s13, 1
        %s241 = scalar_select %p240, %s13, 1
        %s242 = smul.addr %s241, 4
        %s243 = scalar_lea.vmem %s2, %s242
      $region44: #{discriminator_forward.4} parent=35 // pred_fallthru
        _
    $region36: #{discriminator_forward.4} parent=5 // pred_fallthru
      _
    %p244 = scmp.le.s32.totalorder 1, %s13
    %p245 = scmp.lt.s32.totalorder %s13, 3
    %p246 = pnand %p244, %p245
    %p247 = pneg %p246
    // Predicated region
    $region45: #{discriminator_forward.4} parent=5 // pred_check
      _
    $region46: #{discriminator_forward.4} parent=5 // pred_check_branch
      %249 = sbr.rel (%p246) target = $region48
    $region47: #{discriminator_forward.4} parent=5 // pred_region
      %s250 = ssub.s32 %s13, 1
      %p251 = scmp.lt.s32.totalorder %s18, 1
      %s252 = scalar_select %p251, %s18, 1
      %s253 = smul.addr %s252, 4
      %s254 = scalar_lea.vmem %s0, %s253
      %p255 = pneg %p39
      %p256 = pneg %p36
      %p257 = pneg %p60
      %p258 = pneg %p57
      %p259 = scmp.lt.s32.totalorder %s18, 1
      %s260 = scalar_select %p259, %s18, 1
      %s261 = smul.addr %s260, 4
      %s262 = scalar_lea.vmem %s2, %s261
      %p263 = pneg %p86
      %p264 = pneg %p83
      %p265 = pneg %p107
      %p266 = pneg %p104
      %p267 = pneg %p128
      %p268 = pneg %p125
      %p269 = pneg %p149
      %p270 = pneg %p146
      %p271 = pneg %p170
      %p272 = pneg %p167
      %p273 = pneg %p196
      %p274 = pneg %p193
      %p275 = scmp.lt.s32.totalorder %s18, 1
      %s276 = scalar_select %p275, %s18, 1
      %s277 = smul.addr %s276, 4
      %s278 = scalar_lea.vmem %s7, %s277
      %p279 = scmp.lt.s32.totalorder %s18, 1
      %s280 = scalar_select %p279, %s18, 1
      %s281 = smul.addr %s280, 4
      %s282 = scalar_lea.vmem %s0, %s281
      %p283 = scmp.lt.s32.totalorder %s18, 1
      %s284 = scalar_select %p283, %s18, 1
      %s285 = smul.addr %s284, 4
      %s286 = scalar_lea.vmem %s2, %s285
      %p287 = scmp.lt.s32.totalorder %s18, 1
      %s288 = scalar_select %p287, %s18, 1
      %s289 = smul.addr %s288, 4
      %s290 = scalar_lea.vmem %s7, %s289
      %v292 = vld [vmem:[%s286] sm:$0xf]
      %v293 = vunpack.c.l.bf16 %v292
      %v294 = vld [vmem:[%s282] sm:$0xf]
      %v295 = vld [vmem:[%s1] sm:$0xf]
      %v296 = vld [vmem:[%s1 + $0x4] sm:$0xf]
      %v299 = vunpack.c.l.b16 %v295
      %v300 = vunpack.c.l.b16 %v296
      %v301 = vpack.c.b16 %v300, %v299
      %vm303 = vcmask 130048
      %v305 = vsel %vm303, %v294, 0
      %307 = vmatprep.subr.bf16.mxu0 0
      %308 = vmatpush1.bf16.msra.mxu0 0
      %309 = vmatprep.subr.bf16.mxu0 0
      %310 = vmatpush1.bf16.msra.mxu0 0
      %311 = vmatprep.subr.bf16.mxu0 0
      %312 = vmatpush1.bf16.msra.mxu0 0
      %313 = vmatprep.subr.bf16.mxu0 0
      %314 = vmatpush1.bf16.msra.mxu0 0
      %315 = vmatprep.subr.bf16.mxu0 0
      %316 = vmatpush1.bf16.msra.mxu0 0
      %317 = vmatprep.subr.bf16.mxu0 0
      %318 = vmatpush1.bf16.msra.mxu0 0
      %319 = vmatprep.subr.bf16.mxu0 0
      %320 = vmatpush1.bf16.msra.mxu0 0
      %321 = vmatprep.subr.bf16.mxu0 0
      %322 = vmatpush1.bf16.msra.mxu0 %v301
      %323 = vmatprep.subr.bf16.mxu0 0
      %324 = vmatpush2.bf16.msra.mxu0 0
      %325 = vmatprep.subr.bf16.mxu0 0
      %326 = vmatpush2.bf16.msra.mxu0 0
      %327 = vmatprep.subr.bf16.mxu0 0
      %328 = vmatpush2.bf16.msra.mxu0 0
      %329 = vmatprep.subr.bf16.mxu0 0
      %330 = vmatpush2.bf16.msra.mxu0 0
      %331 = vmatprep.subr.bf16.mxu0 0
      %332 = vmatpush2.bf16.msra.mxu0 0
      %333 = vmatprep.subr.bf16.mxu0 0
      %334 = vmatpush2.bf16.msra.mxu0 0
      %335 = vmatprep.subr.bf16.mxu0 0
      %336 = vmatpush2.bf16.msra.mxu0 0
      %337 = vmatprep.subr.bf16.mxu0 0
      %338 = vmatpush2.bf16.msra.mxu0 0
      %339 = vmatprep.mubr.bf16.mxu0 0
      %340 = vmatmul.mubr.bf16.gmra.mxu0 %v305
      %v341 = vpop.f32.mrf.mxu0
      %v342 = vadd.f32 0.0, %v341
      %v343 = vpop.f32.mrf.mxu0
      %v344 = vpop.f32.mrf.mxu0
      %v345 = vpop.f32.mrf.mxu0
      %346 = vdwg.mxu0
      %v347 = vadd.f32 %v293, %v342
      %v348 = vpack.c.bf16 %v347, %v347
      %v349 = vld [vmem:[%s3] sm:$0xf]
      %v350 = vld [vmem:[%s3 + $0x4] sm:$0xf]
      %v351 = vld [vmem:[%s3 + $0x8] sm:$0xf]
      %v352 = vld [vmem:[%s3 + $0xc] sm:$0xf]
      %v353 = vld [vmem:[%s3 + $0x10] sm:$0xf]
      %v354 = vld [vmem:[%s3 + $0x14] sm:$0xf]
      %v355 = vld [vmem:[%s3 + $0x18] sm:$0xf]
      %v356 = vld [vmem:[%s3 + $0x1c] sm:$0xf]
      %v357 = vld [vmem:[%s3 + $0x20] sm:$0xf]
      %v358 = vld [vmem:[%s3 + $0x24] sm:$0xf]
      %v359 = vld [vmem:[%s3 + $0x28] sm:$0xf]
      %v360 = vld [vmem:[%s3 + $0x2c] sm:$0xf]
      %v361 = vld [vmem:[%s3 + $0x30] sm:$0xf]
      %v362 = vld [vmem:[%s3 + $0x34] sm:$0xf]
      %v363 = vld [vmem:[%s3 + $0x38] sm:$0xf]
      %v364 = vld [vmem:[%s3 + $0x3c] sm:$0xf]
      %v365 = vld [vmem:[%s4] sm:$0x1]
      %v367 = vlaneseq
      %v368 = vshrl.u32 %v367, 7
      %v369 = vsub.s32 0, %v368
      %v370 = vrot.slane %v365, %v369
      %v388 = vunpack.c.l.b16 %v349
      %v389 = vunpack.c.l.b16 %v350
      %v390 = vunpack.c.l.b16 %v351
      %v391 = vunpack.c.l.b16 %v352
      %v392 = vunpack.c.l.b16 %v353
      %v393 = vunpack.c.l.b16 %v354
      %v394 = vunpack.c.l.b16 %v355
      %v395 = vunpack.c.l.b16 %v356
      %v396 = vunpack.c.l.b16 %v357
      %v397 = vunpack.c.l.b16 %v358
      %v398 = vunpack.c.l.b16 %v359
      %v399 = vunpack.c.l.b16 %v360
      %v400 = vunpack.c.l.b16 %v361
      %v401 = vunpack.c.l.b16 %v362
      %v402 = vunpack.c.l.b16 %v363
      %v403 = vunpack.c.l.b16 %v364
      %v404 = vpack.c.b16 %v389, %v388
      %v405 = vpack.c.b16 %v391, %v390
      %v406 = vpack.c.b16 %v393, %v392
      %v407 = vpack.c.b16 %v395, %v394
      %v408 = vpack.c.b16 %v397, %v396
      %v409 = vpack.c.b16 %v399, %v398
      %v410 = vpack.c.b16 %v401, %v400
      %v411 = vpack.c.b16 %v403, %v402
      %420 = vmatprep.subr.bf16.mxu0 0
      %421 = vmatpush1.bf16.msra.mxu0 %v411
      %422 = vmatprep.subr.bf16.mxu0 0
      %423 = vmatpush1.bf16.msra.mxu0 %v410
      %424 = vmatprep.subr.bf16.mxu0 0
      %425 = vmatpush1.bf16.msra.mxu0 %v409
      %426 = vmatprep.subr.bf16.mxu0 0
      %427 = vmatpush1.bf16.msra.mxu0 %v408
      %428 = vmatprep.subr.bf16.mxu0 0
      %429 = vmatpush1.bf16.msra.mxu0 %v407
      %430 = vmatprep.subr.bf16.mxu0 0
      %431 = vmatpush1.bf16.msra.mxu0 %v406
      %432 = vmatprep.subr.bf16.mxu0 0
      %433 = vmatpush1.bf16.msra.mxu0 %v405
      %434 = vmatprep.subr.bf16.mxu0 0
      %435 = vmatpush1.bf16.msra.mxu0 %v404
      %436 = vmatprep.subr.bf16.mxu0 0
      %437 = vmatpush2.bf16.msra.mxu0 0
      %438 = vmatprep.subr.bf16.mxu0 0
      %439 = vmatpush2.bf16.msra.mxu0 0
      %440 = vmatprep.subr.bf16.mxu0 0
      %441 = vmatpush2.bf16.msra.mxu0 0
      %442 = vmatprep.subr.bf16.mxu0 0
      %443 = vmatpush2.bf16.msra.mxu0 0
      %444 = vmatprep.subr.bf16.mxu0 0
      %445 = vmatpush2.bf16.msra.mxu0 0
      %446 = vmatprep.subr.bf16.mxu0 0
      %447 = vmatpush2.bf16.msra.mxu0 0
      %448 = vmatprep.subr.bf16.mxu0 0
      %449 = vmatpush2.bf16.msra.mxu0 0
      %450 = vmatprep.subr.bf16.mxu0 0
      %451 = vmatpush2.bf16.msra.mxu0 0
      %452 = vmatprep.mubr.bf16.mxu0 0
      %453 = vmatmul.mubr.bf16.gmra.mxu0 %v348
      %v454 = vpop.f32.mrf.mxu0
      %v455 = vadd.f32 %v370, %v454
      %v456 = vpop.f32.mrf.mxu0
      %v457 = vpop.f32.mrf.mxu0
      %v458 = vpop.f32.mrf.mxu0
      %459 = vdwg.mxu0
      %v460 = vmax.f32 %v455, 0.0
      %v461 = vpack.c.bf16 %v460, %v460
      %v462 = vld [vmem:[%s5] sm:$0xf]
      %v463 = vld [vmem:[%s5 + $0x4] sm:$0xf]
      %v464 = vld [vmem:[%s5 + $0x8] sm:$0xf]
      %v465 = vld [vmem:[%s5 + $0xc] sm:$0xf]
      %v466 = vld [vmem:[%s5 + $0x10] sm:$0xf]
      %v467 = vld [vmem:[%s5 + $0x14] sm:$0xf]
      %v468 = vld [vmem:[%s5 + $0x18] sm:$0xf]
      %v469 = vld [vmem:[%s5 + $0x1c] sm:$0xf]
      %v470 = vld [vmem:[%s5 + $0x20] sm:$0xf]
      %v471 = vld [vmem:[%s5 + $0x24] sm:$0xf]
      %v472 = vld [vmem:[%s5 + $0x28] sm:$0xf]
      %v473 = vld [vmem:[%s5 + $0x2c] sm:$0xf]
      %v474 = vld [vmem:[%s5 + $0x30] sm:$0xf]
      %v475 = vld [vmem:[%s5 + $0x34] sm:$0xf]
      %v476 = vld [vmem:[%s5 + $0x38] sm:$0xf]
      %v477 = vld [vmem:[%s5 + $0x3c] sm:$0xf]
      %v478 = vld [vmem:[%s6] sm:$0x1]
      %v480 = vlaneseq
      %v481 = vshrl.u32 %v480, 7
      %v482 = vsub.s32 0, %v481
      %v483 = vrot.slane %v478, %v482
      %v501 = vunpack.c.l.b16 %v462
      %v502 = vunpack.c.l.b16 %v463
      %v503 = vunpack.c.l.b16 %v464
      %v504 = vunpack.c.l.b16 %v465
      %v505 = vunpack.c.l.b16 %v466
      %v506 = vunpack.c.l.b16 %v467
      %v507 = vunpack.c.l.b16 %v468
      %v508 = vunpack.c.l.b16 %v469
      %v509 = vunpack.c.l.b16 %v470
      %v510 = vunpack.c.l.b16 %v471
      %v511 = vunpack.c.l.b16 %v472
      %v512 = vunpack.c.l.b16 %v473
      %v513 = vunpack.c.l.b16 %v474
      %v514 = vunpack.c.l.b16 %v475
      %v515 = vunpack.c.l.b16 %v476
      %v516 = vunpack.c.l.b16 %v477
      %v517 = vpack.c.b16 %v502, %v501
      %v518 = vpack.c.b16 %v504, %v503
      %v519 = vpack.c.b16 %v506, %v505
      %v520 = vpack.c.b16 %v508, %v507
      %v521 = vpack.c.b16 %v510, %v509
      %v522 = vpack.c.b16 %v512, %v511
      %v523 = vpack.c.b16 %v514, %v513
      %v524 = vpack.c.b16 %v516, %v515
      %533 = vmatprep.subr.bf16.mxu0 0
      %534 = vmatpush1.bf16.msra.mxu0 %v524
      %535 = vmatprep.subr.bf16.mxu0 0
      %536 = vmatpush1.bf16.msra.mxu0 %v523
      %537 = vmatprep.subr.bf16.mxu0 0
      %538 = vmatpush1.bf16.msra.mxu0 %v522
      %539 = vmatprep.subr.bf16.mxu0 0
      %540 = vmatpush1.bf16.msra.mxu0 %v521
      %541 = vmatprep.subr.bf16.mxu0 0
      %542 = vmatpush1.bf16.msra.mxu0 %v520
      %543 = vmatprep.subr.bf16.mxu0 0
      %544 = vmatpush1.bf16.msra.mxu0 %v519
      %545 = vmatprep.subr.bf16.mxu0 0
      %546 = vmatpush1.bf16.msra.mxu0 %v518
      %547 = vmatprep.subr.bf16.mxu0 0
      %548 = vmatpush1.bf16.msra.mxu0 %v517
      %549 = vmatprep.subr.bf16.mxu0 0
      %550 = vmatpush2.bf16.msra.mxu0 0
      %551 = vmatprep.subr.bf16.mxu0 0
      %552 = vmatpush2.bf16.msra.mxu0 0
      %553 = vmatprep.subr.bf16.mxu0 0
      %554 = vmatpush2.bf16.msra.mxu0 0
      %555 = vmatprep.subr.bf16.mxu0 0
      %556 = vmatpush2.bf16.msra.mxu0 0
      %557 = vmatprep.subr.bf16.mxu0 0
      %558 = vmatpush2.bf16.msra.mxu0 0
      %559 = vmatprep.subr.bf16.mxu0 0
      %560 = vmatpush2.bf16.msra.mxu0 0
      %561 = vmatprep.subr.bf16.mxu0 0
      %562 = vmatpush2.bf16.msra.mxu0 0
      %563 = vmatprep.subr.bf16.mxu0 0
      %564 = vmatpush2.bf16.msra.mxu0 0
      %565 = vmatprep.mubr.bf16.mxu0 0
      %566 = vmatmul.mubr.bf16.gmra.mxu0 %v461
      %v567 = vpop.f32.mrf.mxu0
      %v568 = vadd.f32 %v483, %v567
      %v569 = vpop.f32.mrf.mxu0
      %v570 = vpop.f32.mrf.mxu0
      %v571 = vpop.f32.mrf.mxu0
      %572 = vdwg.mxu0
      %v573 = vpack.c.bf16 %v568, %v568
      %574 = vst [vmem:[%s290] sm:$0xf] %v573
      %p575 = scmp.lt.s32.totalorder %s18, 1
      %s576 = scalar_select %p575, %s18, 1
      %s577 = smul.addr %s576, 4
      %s578 = scalar_lea.vmem %s7, %s577
      // Predicated region
      $region49: #{discriminator_forward.4} parent=47 // pred_check
        %p579 = pneg %p193
      $region50: #{discriminator_forward.4} parent=47 // pred_check_branch
        %581 = sbr.rel (%p579) target = $region52
      $region51: #{discriminator_forward.4} parent=47 // pred_region
        _
      $region52: #{discriminator_forward.4} parent=47 // pred_fallthru
        _
    $region48: #{discriminator_forward.4} parent=5 // pred_fallthru
      _
    %p582 = scmp.le.s32.totalorder 2, %s13
    // Predicated region
    $region53: #{discriminator_forward.4} parent=5 // pred_check
      %p583 = pneg %p582
    $region54: #{discriminator_forward.4} parent=5 // pred_check_branch
      %585 = sbr.rel (%p583) target = $region56
    $region55: #{discriminator_forward.4} parent=5 // pred_region
      %s586 = ssub.s32 %s13, 2
      // Predicated region
      $region57: #{discriminator_forward.4} parent=55 // pred_check
        %p587 = pneg %p199
      $region58: #{discriminator_forward.4} parent=55 // pred_check_branch
        %589 = sbr.rel (%p587) target = $region60
      $region59: #{discriminator_forward.4} parent=55 // pred_region
        %p590 = scmp.lt.s32.totalorder %s19, 1
        %s591 = scalar_select %p590, %s19, 1
        %s592 = smul.addr %s591, 4
        %s593 = scalar_lea.vmem %s7, %s592
      $region60: #{discriminator_forward.4} parent=55 // pred_fallthru
        _
    $region56: #{discriminator_forward.4} parent=5 // pred_fallthru
      _
  $region6: #{discriminator_forward.4} parent=0 // loop_footer
    %s17 = sadd.s32 1, %s13
  $region7: #{discriminator_forward.4} parent=0 // loop_footer_branch
    %12 = sbr.rel target = $region3
  $region8: #{discriminator_forward.4} parent=0 // loop_exit
    _

</llo_original>
